<compile_context>
chip_gen: v7x
topology: tpu7x:2x2x1
jax: 0.10.0
libtpu: 0.0.40
codegen_flags: <defaults>
</compile_context>

<pallas_src>
import functools

import jax
import jax.numpy as jnp
from jax.experimental import pallas as pl
from jax.experimental.pallas import tpu as pltpu

# dropout probabilities (the d2l globals `dropout1` / `dropout2`)
DROPOUT1 = 0.2
DROPOUT2 = 0.5


def _round_up(x, m):
    return ((x + m - 1) // m) * m


def mlp_kernel(x_ref, w1_ref, b1_ref, w2_ref, b2_ref, w3_ref, b3_ref,
               *rest, training):
    if training:
        u1_ref, u2_ref, out_ref = rest
    else:
        (out_ref,) = rest

    x = x_ref[...]                                            # bf16 (TILE_B, NI)

    # ---- lin1 + relu (+ dropout1): bf16 matmul, f32 accumulate / elementwise
    h1 = jnp.dot(x, w1_ref[...], preferred_element_type=jnp.float32)
    h1 = jnp.maximum(h1 + b1_ref[...], 0.0)
    if training:
        keep1 = u1_ref[...] >= DROPOUT1
        h1 = jnp.where(keep1, h1 * (1.0 / (1.0 - DROPOUT1)), 0.0)
    h1 = h1.astype(jnp.bfloat16)

    # ---- lin2 + relu (+ dropout2)
    h2 = jnp.dot(h1, w2_ref[...], preferred_element_type=jnp.float32)
    h2 = jnp.maximum(h2 + b2_ref[...], 0.0)
    if training:
        keep2 = u2_ref[...] >= DROPOUT2
        h2 = jnp.where(keep2, h2 * (1.0 / (1.0 - DROPOUT2)), 0.0)
    h2 = h2.astype(jnp.bfloat16)

    # ---- lin3 (no activation), lane-dense padded output
    out = jnp.dot(h2, w3_ref[...], preferred_element_type=jnp.float32)
    out_ref[...] = (out + b3_ref[...]).astype(out_ref.dtype)


def net_forward(x, params, *, num_inputs, training=True, key=None,
                tile_b=512):
    """Pallas forward pass of Net.

    x: any shape whose trailing dims flatten to num_inputs.
    params: dict w1,b1,w2,b2,w3,b3; weights stored as (in, out) = torch W.T.
    """
    x2d = x.reshape((-1, num_inputs))
    B = x2d.shape[0]
    H1 = params["w1"].shape[1]
    H2 = params["w2"].shape[1]
    num_outputs = params["w3"].shape[1]
    out_pad = _round_up(max(num_outputs, 128), 128)           # lane-dense out

    # batch tiling: multiple of 8 sublanes, clamp tile to (padded) batch
    tile_b = _round_up(min(tile_b, _round_up(max(B, 8), 8)), 8)
    b_pad = _round_up(B, tile_b)
    grid = (b_pad // tile_b,)

    # ---- operand prep: bf16 matmul inputs, f32 biases, padded shapes
    x_p = jnp.zeros((b_pad, num_inputs), jnp.bfloat16)
    x_p = x_p.at[:B].set(x2d.astype(jnp.bfloat16))

    w1 = params["w1"].astype(jnp.bfloat16)
    w2 = params["w2"].astype(jnp.bfloat16)
    b1 = params["b1"].astype(jnp.float32).reshape(1, H1)
    b2 = params["b2"].astype(jnp.float32).reshape(1, H2)

    w3 = jnp.zeros((H2, out_pad), jnp.bfloat16)
    w3 = w3.at[:, :num_outputs].set(params["w3"].astype(jnp.bfloat16))
    b3 = jnp.zeros((1, out_pad), jnp.float32)
    b3 = b3.at[:, :num_outputs].set(params["b3"].astype(jnp.float32).reshape(1, -1))

    const_spec = lambda shape: pl.BlockSpec(shape, lambda i: (0, 0))
    batch_spec = lambda cols: pl.BlockSpec((tile_b, cols), lambda i: (i, 0))

    in_specs = [
        batch_spec(num_inputs),            # x tile
        const_spec((num_inputs, H1)),      # w1 (resident)
        const_spec((1, H1)),               # b1
        const_spec((H1, H2)),              # w2
        const_spec((1, H2)),               # b2
        const_spec((H2, out_pad)),         # w3
        const_spec((1, out_pad)),          # b3
    ]
    inputs = [x_p, w1, b1, w2, b2, w3, b3]

    if training:
        if key is None:
            key = jax.random.PRNGKey(0)
        k1, k2 = jax.random.split(key)
        u1 = jax.random.uniform(k1, (b_pad, H1), jnp.float32)
        u2 = jax.random.uniform(k2, (b_pad, H2), jnp.float32)
        in_specs += [batch_spec(H1), batch_spec(H2)]
        inputs += [u1, u2]

    flops = 2 * b_pad * (num_inputs * H1 + H1 * H2 + H2 * out_pad)
    bytes_accessed = (x_p.size * 2 + w1.size * 2 + w2.size * 2 + w3.size * 2
                      + (b1.size + b2.size + b3.size) * 4
                      + (u1.size + u2.size) * 4 if training else 0)
    bytes_accessed += x_p.size * 2 + b_pad * out_pad * 4

    kernel = functools.partial(mlp_kernel, training=training)

    out = pl.pallas_call(
        kernel,
        out_shape=jax.ShapeDtypeStruct((b_pad, out_pad), jnp.float32),
        grid=grid,
        in_specs=in_specs,
        out_specs=pl.BlockSpec((tile_b, out_pad), lambda i: (i, 0)),
        compiler_params=pltpu.CompilerParams(
            dimension_semantics=("parallel",),
            vmem_limit_bytes=64 * 1024 * 1024,
        ),
        cost_estimate=pl.CostEstimate(
            flops=flops, transcendentals=0, bytes_accessed=int(bytes_accessed)),
    )(*inputs)

    return out[:B, :num_outputs]


def init_params(key, num_inputs, num_hiddens1, num_hiddens2, num_outputs):
    """Deterministic synthetic init (weights stored (in, out) = torch W.T)."""
    k1, k2, k3 = jax.random.split(key, 3)

    def lin(k, fan_in, fan_out):
        bound = 1.0 / jnp.sqrt(fan_in)
        kw, kb = jax.random.split(k)
        w = jax.random.uniform(kw, (fan_in, fan_out), jnp.float32, -bound, bound)
        b = jax.random.uniform(kb, (1, fan_out), jnp.float32, -bound, bound)
        return w, b

    w1, b1 = lin(k1, num_inputs, num_hiddens1)
    w2, b2 = lin(k2, num_hiddens1, num_hiddens2)
    w3, b3 = lin(k3, num_hiddens2, num_outputs)
    return {"w1": w1, "b1": b1, "w2": w2, "b2": b2, "w3": w3, "b3": b3}


if __name__ == "__main__":
    # Small, MLP-consistent shapes: X is NCHW [2, 4, 16, 16] -> num_inputs=1024.
    num_inputs, num_hiddens1, num_hiddens2, num_outputs = 1024, 256, 128, 10

    key = jax.random.PRNGKey(0)
    kx, kp, kd = jax.random.split(key, 3)
    x = jax.random.normal(kx, (2, 4, 16, 16), dtype=jnp.float32)
    params = init_params(kp, num_inputs, num_hiddens1, num_hiddens2, num_outputs)

    out = net_forward(x, params, num_inputs=num_inputs, training=True, key=kd)
    out = jax.block_until_ready(out)
    assert out.shape == (2, num_outputs) and out.dtype == jnp.float32

    # also exercise eval mode (no dropout)
    out_eval = jax.block_until_ready(
        net_forward(x, params, num_inputs=num_inputs, training=False))
    assert out_eval.shape == (2, num_outputs)

    print("KERNEL_OK")
</pallas_src>

<mosaic_0001>
module attributes {stable_mosaic.version = 11 : i64} {
  func.func @mlp_kernel(%arg0: i32, %arg1: memref<8x1024xbf16, #tpu.memory_space<vmem>>, %arg2: memref<1024x256xbf16, #tpu.memory_space<vmem>>, %arg3: memref<1x256xf32, #tpu.memory_space<vmem>>, %arg4: memref<256x128xbf16, #tpu.memory_space<vmem>>, %arg5: memref<1x128xf32, #tpu.memory_space<vmem>>, %arg6: memref<128x128xbf16, #tpu.memory_space<vmem>>, %arg7: memref<1x128xf32, #tpu.memory_space<vmem>>, %arg8: memref<8x256xf32, #tpu.memory_space<vmem>>, %arg9: memref<8x128xf32, #tpu.memory_space<vmem>>, %arg10: memref<8x128xf32, #tpu.memory_space<vmem>>) attributes {dimension_semantics = [#tpu.dimension_semantics<parallel>], iteration_bounds = array<i64: 1>, scalar_prefetch = 0 : i64, scratch_operands = 0 : i64, tpu.core_type = #tpu.core_type<tc>, window_params = [{transform_indices = @transform_0, window_bounds = array<i64: 8, 1024>}, {pipeline_mode = #tpu.pipeline_mode<synchronous>, transform_indices = @transform_1, window_bounds = array<i64: 1024, 256>}, {pipeline_mode = #tpu.pipeline_mode<synchronous>, transform_indices = @transform_2, window_bounds = array<i64: 1, 256>}, {pipeline_mode = #tpu.pipeline_mode<synchronous>, transform_indices = @transform_3, window_bounds = array<i64: 256, 128>}, {pipeline_mode = #tpu.pipeline_mode<synchronous>, transform_indices = @transform_4, window_bounds = array<i64: 1, 128>}, {pipeline_mode = #tpu.pipeline_mode<synchronous>, transform_indices = @transform_5, window_bounds = array<i64: 128, 128>}, {pipeline_mode = #tpu.pipeline_mode<synchronous>, transform_indices = @transform_6, window_bounds = array<i64: 1, 128>}, {transform_indices = @transform_7, window_bounds = array<i64: 8, 256>}, {transform_indices = @transform_8, window_bounds = array<i64: 8, 128>}, {transform_indices = @transform_9, window_bounds = array<i64: 8, 128>}]} {
    %c0 = arith.constant 0 : index
    %c0_0 = arith.constant 0 : index
    %0 = vector.load %arg1[%c0, %c0_0] : memref<8x1024xbf16, #tpu.memory_space<vmem>>, vector<8x1024xbf16>
    %c0_1 = arith.constant 0 : index
    %c0_2 = arith.constant 0 : index
    %1 = vector.load %arg2[%c0_1, %c0_2] : memref<1024x256xbf16, #tpu.memory_space<vmem>>, vector<1024x256xbf16>
    %cst = arith.constant dense<0.000000e+00> : vector<8x256xf32>
    %2 = tpu.matmul %0, %1, %cst {dimension_numbers = #tpu.dot_dimension_numbers<[1], [0], [0], [1], [0, 0, 1, 1], [], []>} : vector<8x1024xbf16>, vector<1024x256xbf16>, vector<8x256xf32> -> vector<8x256xf32>
    %c0_3 = arith.constant 0 : index
    %c0_4 = arith.constant 0 : index
    %3 = vector.load %arg3[%c0_3, %c0_4] : memref<1x256xf32, #tpu.memory_space<vmem>>, vector<1x256xf32>
    %4 = vector.broadcast %3 : vector<1x256xf32> to vector<8x256xf32>
    %5 = arith.addf %2, %4 : vector<8x256xf32>
    %cst_5 = arith.constant 0.000000e+00 : f32
    %6 = vector.broadcast %cst_5 : f32 to vector<8x256xf32>
    %7 = arith.maximumf %5, %6 : vector<8x256xf32>
    %c0_6 = arith.constant 0 : index
    %c0_7 = arith.constant 0 : index
    %8 = vector.load %arg8[%c0_6, %c0_7] : memref<8x256xf32, #tpu.memory_space<vmem>>, vector<8x256xf32>
    %cst_8 = arith.constant 2.000000e-01 : f32
    %9 = vector.broadcast %cst_8 : f32 to vector<8x256xf32>
    %10 = arith.cmpf oge, %8, %9 : vector<8x256xf32>
    %cst_9 = arith.constant 1.250000e+00 : f32
    %11 = vector.broadcast %cst_9 : f32 to vector<8x256xf32>
    %12 = arith.mulf %7, %11 : vector<8x256xf32>
    %cst_10 = arith.constant 0.000000e+00 : f32
    %13 = vector.broadcast %cst_10 : f32 to vector<8x256xf32>
    %14 = arith.select %10, %12, %13 : vector<8x256xi1>, vector<8x256xf32>
    %15 = arith.truncf %14 : vector<8x256xf32> to vector<8x256xbf16>
    %c0_11 = arith.constant 0 : index
    %c0_12 = arith.constant 0 : index
    %16 = vector.load %arg4[%c0_11, %c0_12] : memref<256x128xbf16, #tpu.memory_space<vmem>>, vector<256x128xbf16>
    %cst_13 = arith.constant dense<0.000000e+00> : vector<8x128xf32>
    %17 = tpu.matmul %15, %16, %cst_13 {dimension_numbers = #tpu.dot_dimension_numbers<[1], [0], [0], [1], [0, 0, 1, 1], [], []>} : vector<8x256xbf16>, vector<256x128xbf16>, vector<8x128xf32> -> vector<8x128xf32>
    %c0_14 = arith.constant 0 : index
    %c0_15 = arith.constant 0 : index
    %18 = vector.load %arg5[%c0_14, %c0_15] : memref<1x128xf32, #tpu.memory_space<vmem>>, vector<1x128xf32>
    %19 = vector.broadcast %18 : vector<1x128xf32> to vector<8x128xf32>
    %20 = arith.addf %17, %19 : vector<8x128xf32>
    %cst_16 = arith.constant 0.000000e+00 : f32
    %21 = vector.broadcast %cst_16 : f32 to vector<8x128xf32>
    %22 = arith.maximumf %20, %21 : vector<8x128xf32>
    %c0_17 = arith.constant 0 : index
    %c0_18 = arith.constant 0 : index
    %23 = vector.load %arg9[%c0_17, %c0_18] : memref<8x128xf32, #tpu.memory_space<vmem>>, vector<8x128xf32>
    %cst_19 = arith.constant 5.000000e-01 : f32
    %24 = vector.broadcast %cst_19 : f32 to vector<8x128xf32>
    %25 = arith.cmpf oge, %23, %24 : vector<8x128xf32>
    %cst_20 = arith.constant 2.000000e+00 : f32
    %26 = vector.broadcast %cst_20 : f32 to vector<8x128xf32>
    %27 = arith.mulf %22, %26 : vector<8x128xf32>
    %cst_21 = arith.constant 0.000000e+00 : f32
    %28 = vector.broadcast %cst_21 : f32 to vector<8x128xf32>
    %29 = arith.select %25, %27, %28 : vector<8x128xi1>, vector<8x128xf32>
    %30 = arith.truncf %29 : vector<8x128xf32> to vector<8x128xbf16>
    %c0_22 = arith.constant 0 : index
    %c0_23 = arith.constant 0 : index
    %31 = vector.load %arg6[%c0_22, %c0_23] : memref<128x128xbf16, #tpu.memory_space<vmem>>, vector<128x128xbf16>
    %cst_24 = arith.constant dense<0.000000e+00> : vector<8x128xf32>
    %32 = tpu.matmul %30, %31, %cst_24 {dimension_numbers = #tpu.dot_dimension_numbers<[1], [0], [0], [1], [0, 0, 1, 1], [], []>} : vector<8x128xbf16>, vector<128x128xbf16>, vector<8x128xf32> -> vector<8x128xf32>
    %c0_25 = arith.constant 0 : index
    %c0_26 = arith.constant 0 : index
    %33 = vector.load %arg7[%c0_25, %c0_26] : memref<1x128xf32, #tpu.memory_space<vmem>>, vector<1x128xf32>
    %34 = vector.broadcast %33 : vector<1x128xf32> to vector<8x128xf32>
    %35 = arith.addf %32, %34 : vector<8x128xf32>
    %c0_27 = arith.constant 0 : index
    %c0_28 = arith.constant 0 : index
    %36 = vector.load %arg10[%c0_27, %c0_28] : memref<8x128xf32, #tpu.memory_space<vmem>>, vector<8x128xf32>
    tpu.vector_store %arg10[%c0_27, %c0_28], %35 {strides = array<i32>} : memref<8x128xf32, #tpu.memory_space<vmem>>, vector<8x128xf32>,
    return
  }
  func.func @transform_0(%arg0: i32) -> (i32, i32) {
    %c0_i32 = arith.constant 0 : i32
    %c0_i32_0 = arith.constant 0 : i32
    return %arg0, %c0_i32 : i32, i32
  }
  func.func @transform_1(%arg0: i32) -> (i32, i32) {
    %c0_i32 = arith.constant 0 : i32
    %c0_i32_0 = arith.constant 0 : i32
    %c0_i32_1 = arith.constant 0 : i32
    return %c0_i32, %c0_i32_0 : i32, i32
  }
  func.func @transform_2(%arg0: i32) -> (i32, i32) {
    %c0_i32 = arith.constant 0 : i32
    %c0_i32_0 = arith.constant 0 : i32
    %c0_i32_1 = arith.constant 0 : i32
    return %c0_i32, %c0_i32_0 : i32, i32
  }
  func.func @transform_3(%arg0: i32) -> (i32, i32) {
    %c0_i32 = arith.constant 0 : i32
    %c0_i32_0 = arith.constant 0 : i32
    %c0_i32_1 = arith.constant 0 : i32
    return %c0_i32, %c0_i32_0 : i32, i32
  }
  func.func @transform_4(%arg0: i32) -> (i32, i32) {
    %c0_i32 = arith.constant 0 : i32
    %c0_i32_0 = arith.constant 0 : i32
    %c0_i32_1 = arith.constant 0 : i32
    return %c0_i32, %c0_i32_0 : i32, i32
  }
  func.func @transform_5(%arg0: i32) -> (i32, i32) {
    %c0_i32 = arith.constant 0 : i32
    %c0_i32_0 = arith.constant 0 : i32
    %c0_i32_1 = arith.constant 0 : i32
    return %c0_i32, %c0_i32_0 : i32, i32
  }
  func.func @transform_6(%arg0: i32) -> (i32, i32) {
    %c0_i32 = arith.constant 0 : i32
    %c0_i32_0 = arith.constant 0 : i32
    %c0_i32_1 = arith.constant 0 : i32
    return %c0_i32, %c0_i32_0 : i32, i32
  }
  func.func @transform_7(%arg0: i32) -> (i32, i32) {
    %c0_i32 = arith.constant 0 : i32
    %c0_i32_0 = arith.constant 0 : i32
    return %arg0, %c0_i32 : i32, i32
  }
  func.func @transform_8(%arg0: i32) -> (i32, i32) {
    %c0_i32 = arith.constant 0 : i32
    %c0_i32_0 = arith.constant 0 : i32
    return %arg0, %c0_i32 : i32, i32
  }
  func.func @transform_9(%arg0: i32) -> (i32, i32) {
    %c0_i32 = arith.constant 0 : i32
    %c0_i32_0 = arith.constant 0 : i32
    return %arg0, %c0_i32 : i32, i32
  }
}

</mosaic_0001>

<llo_original>
// kernel: tpu_custom_call.1
$region0: #{tpu_custom_call.1}
  #allocation0 [shape = 'u32[]', space=smem, size = 0x4, offset = 0x4, fixed_abs, tag = 'smem constant byte address 0x4 - core index']
  #allocation1 [shape = 'u32[144,128]{1,0:T(1,128)}', space=vmem, size = 0x12000, scoped, tag = 'internal scratch']
  %s0 = inlined_call_operand.hbm [shape: bf16[8,1024], index: 0, kind: input, shape index: {}]
  %s1 = inlined_call_operand.hbm [shape: bf16[1024,256], index: 1, kind: input, shape index: {}]
  %s2 = inlined_call_operand.hbm [shape: f32[1,256], index: 2, kind: input, shape index: {}]
  %s3 = inlined_call_operand.hbm [shape: bf16[256,128], index: 3, kind: input, shape index: {}]
  %s4 = inlined_call_operand.hbm [shape: f32[1,128], index: 4, kind: input, shape index: {}]
  %s5 = inlined_call_operand.hbm [shape: bf16[128,128], index: 5, kind: input, shape index: {}]
  %s6 = inlined_call_operand.hbm [shape: f32[1,128], index: 6, kind: input, shape index: {}]
  %s7 = inlined_call_operand.hbm [shape: f32[8,256], index: 7, kind: input, shape index: {}]
  %s8 = inlined_call_operand.hbm [shape: f32[8,128], index: 8, kind: input, shape index: {}]
  %s9 = inlined_call_operand.hbm [shape: f32[8,128], index: 9, kind: output, shape index: {}]
  %s10 = sld [smem:[#allocation0]]
  $region82: #{tpu_custom_call.1} parent=0
    _
  %s12 = ssub.s32 1, %s10
  %s13 = scalar_select 0, %s12, %s10
  $region1: #{tpu_custom_call.1} parent=0
    #allocation2 [shape = 'u8[16384]{0}', space=vmem, size = 0x4000, scoped, tag = 'input window, operand 0, single buffered']
    #allocation3 [shape = 's32[1]{0}', space=sflag, size = 0x4, scoped, tag = 'scoped memory for tpu_custom_call.1']
    #allocation4 [shape = 's32[1]{0}', space=sflag, size = 0x4, scoped, tag = 'scoped memory for tpu_custom_call.1']
    #allocation5 [shape = 'u8[524288]{0}', space=vmem, size = 0x80000, scoped, tag = 'input window, operand 1, single buffered']
    #allocation6 [shape = 's32[1]{0}', space=sflag, size = 0x4, scoped, tag = 'scoped memory for tpu_custom_call.1']
    #allocation7 [shape = 'u8[1024]{0}', space=vmem, size = 0x400, scoped, tag = 'input window, operand 2, single buffered']
    #allocation8 [shape = 'u8[65536]{0}', space=vmem, size = 0x10000, scoped, tag = 'input window, operand 3, single buffered']
    #allocation9 [shape = 's32[1]{0}', space=sflag, size = 0x4, scoped, tag = 'scoped memory for tpu_custom_call.1']
    #allocation10 [shape = 'u8[512]{0}', space=vmem, size = 0x400, scoped, tag = 'input window, operand 4, single buffered']
    #allocation11 [shape = 'u8[32768]{0}', space=vmem, size = 0x8000, scoped, tag = 'input window, operand 5, single buffered']
    #allocation12 [shape = 's32[1]{0}', space=sflag, size = 0x4, scoped, tag = 'scoped memory for tpu_custom_call.1']
    #allocation13 [shape = 'u8[512]{0}', space=vmem, size = 0x400, scoped, tag = 'input window, operand 6, single buffered']
    #allocation14 [shape = 'u8[8192]{0}', space=vmem, size = 0x2000, scoped, tag = 'input window, operand 7, single buffered']
    #allocation15 [shape = 's32[1]{0}', space=sflag, size = 0x4, scoped, tag = 'scoped memory for tpu_custom_call.1']
    #allocation16 [shape = 'u8[4096]{0}', space=vmem, size = 0x1000, scoped, tag = 'input window, operand 8, single buffered']
    #allocation17 [shape = 'u8[4096]{0}', space=vmem, size = 0x1000, scoped, tag = 'output window, operand 0, single buffered']
    %14 = vsyncpa [#allocation3], 0
    %15 = vsyncpa [#allocation6], 0
    %16 = vsyncpa [#allocation9], 0
    %17 = vsyncpa [#allocation12], 0
    %18 = vsyncpa [#allocation15], 0
    %19 = vsyncpa [#allocation4], 0
    // Predicated region
    $region2: #{tpu_custom_call.1} parent=1 // pred_check
      _
    $region3: #{tpu_custom_call.1} parent=1 // pred_check_branch
      %21 = sbr.rel (0) target = $region5
    $region4: #{tpu_custom_call.1} parent=1 // pred_region
      %s23 = ssub.s32 512, 512
      %24 = vsyncadd [#allocation3], %s23
      %s26 = sshll.u32 [#allocation2], 4
      %s27 = int_to_ptr.vmem [resolvable:$true] %s26
      %29 = dma.hbm_to_vmem [thread:$0]  %s0, 512, %s27, [#allocation3]
    $region5: #{tpu_custom_call.1} parent=1 // pred_fallthru
      _
    // Predicated region
    $region6: #{tpu_custom_call.1} parent=1 // pred_check
      _
    $region7: #{tpu_custom_call.1} parent=1 // pred_check_branch
      %31 = sbr.rel (0) target = $region9
    $region8: #{tpu_custom_call.1} parent=1 // pred_region
      %s33 = ssub.s32 16384, 16384
      %34 = vsyncadd [#allocation6], %s33
      %s35 = sshll.u32 [#allocation5], 4
      %s36 = int_to_ptr.vmem [resolvable:$true] %s35
      %41 = dma.hbm_to_vmem [thread:$0]  %s1, 16384, %s36, [#allocation6], 128, 128, 8
    $region9: #{tpu_custom_call.1} parent=1 // pred_fallthru
      _
    // Predicated region
    $region10: #{tpu_custom_call.1} parent=1 // pred_check
      _
    $region11: #{tpu_custom_call.1} parent=1 // pred_check_branch
      %43 = sbr.rel (0) target = $region13
    $region12: #{tpu_custom_call.1} parent=1 // pred_region
      %s45 = ssub.s32 32, 32
      %46 = vsyncadd [#allocation6], %s45
      %s48 = sshll.u32 [#allocation7], 4
      %s49 = int_to_ptr.vmem [resolvable:$true] %s48
      %51 = dma.hbm_to_vmem [thread:$0]  %s2, 32, %s49, [#allocation6]
    $region13: #{tpu_custom_call.1} parent=1 // pred_fallthru
      _
    // Predicated region
    $region14: #{tpu_custom_call.1} parent=1 // pred_check
      _
    $region15: #{tpu_custom_call.1} parent=1 // pred_check_branch
      %53 = sbr.rel (0) target = $region17
    $region16: #{tpu_custom_call.1} parent=1 // pred_region
      %s55 = ssub.s32 2048, 2048
      %56 = vsyncadd [#allocation9], %s55
      %s57 = sshll.u32 [#allocation8], 4
      %s58 = int_to_ptr.vmem [resolvable:$true] %s57
      %63 = dma.hbm_to_vmem [thread:$0]  %s3, 2048, %s58, [#allocation9], 64, 64, 4
    $region17: #{tpu_custom_call.1} parent=1 // pred_fallthru
      _
    // Predicated region
    $region18: #{tpu_custom_call.1} parent=1 // pred_check
      _
    $region19: #{tpu_custom_call.1} parent=1 // pred_check_branch
      %65 = sbr.rel (0) target = $region21
    $region20: #{tpu_custom_call.1} parent=1 // pred_region
      %s67 = ssub.s32 16, 16
      %68 = vsyncadd [#allocation9], %s67
      %s70 = sshll.u32 [#allocation10], 4
      %s71 = int_to_ptr.vmem [resolvable:$true] %s70
      %73 = dma.hbm_to_vmem [thread:$0]  %s4, 16, %s71, [#allocation9]
    $region21: #{tpu_custom_call.1} parent=1 // pred_fallthru
      _
    // Predicated region
    $region22: #{tpu_custom_call.1} parent=1 // pred_check
      _
    $region23: #{tpu_custom_call.1} parent=1 // pred_check_branch
      %75 = sbr.rel (0) target = $region25
    $region24: #{tpu_custom_call.1} parent=1 // pred_region
      %s77 = ssub.s32 1024, 1024
      %78 = vsyncadd [#allocation12], %s77
      %s79 = sshll.u32 [#allocation11], 4
      %s80 = int_to_ptr.vmem [resolvable:$true] %s79
      %85 = dma.hbm_to_vmem [thread:$0]  %s5, 1024, %s80, [#allocation12], 64, 64, 4
    $region25: #{tpu_custom_call.1} parent=1 // pred_fallthru
      _
    // Predicated region
    $region26: #{tpu_custom_call.1} parent=1 // pred_check
      _
    $region27: #{tpu_custom_call.1} parent=1 // pred_check_branch
      %87 = sbr.rel (0) target = $region29
    $region28: #{tpu_custom_call.1} parent=1 // pred_region
      %s89 = ssub.s32 16, 16
      %90 = vsyncadd [#allocation12], %s89
      %s92 = sshll.u32 [#allocation13], 4
      %s93 = int_to_ptr.vmem [resolvable:$true] %s92
      %95 = dma.hbm_to_vmem [thread:$0]  %s6, 16, %s93, [#allocation12]
    $region29: #{tpu_custom_call.1} parent=1 // pred_fallthru
      _
    // Predicated region
    $region30: #{tpu_custom_call.1} parent=1 // pred_check
      _
    $region31: #{tpu_custom_call.1} parent=1 // pred_check_branch
      %97 = sbr.rel (0) target = $region33
    $region32: #{tpu_custom_call.1} parent=1 // pred_region
      %s99 = ssub.s32 256, 256
      %100 = vsyncadd [#allocation15], %s99
      %s102 = sshll.u32 [#allocation14], 4
      %s103 = int_to_ptr.vmem [resolvable:$true] %s102
      %105 = dma.hbm_to_vmem [thread:$0]  %s7, 256, %s103, [#allocation15]
    $region33: #{tpu_custom_call.1} parent=1 // pred_fallthru
      _
    // Predicated region
    $region34: #{tpu_custom_call.1} parent=1 // pred_check
      _
    $region35: #{tpu_custom_call.1} parent=1 // pred_check_branch
      %107 = sbr.rel (0) target = $region37
    $region36: #{tpu_custom_call.1} parent=1 // pred_region
      %s109 = ssub.s32 128, 128
      %110 = vsyncadd [#allocation15], %s109
      %s112 = sshll.u32 [#allocation16], 4
      %s113 = int_to_ptr.vmem [resolvable:$true] %s112
      %115 = dma.hbm_to_vmem [thread:$0]  %s8, 128, %s113, [#allocation15]
    $region37: #{tpu_custom_call.1} parent=1 // pred_fallthru
      _
    // Predicated region
    $region38: #{tpu_custom_call.1} parent=1 // pred_check
      _
    $region39: #{tpu_custom_call.1} parent=1 // pred_check_branch
      %117 = sbr.rel (0) target = $region41
    $region40: #{tpu_custom_call.1} parent=1 // pred_region
      %118 = dma.done [#allocation3], 512
    $region41: #{tpu_custom_call.1} parent=1 // pred_fallthru
      _
    // Predicated region
    $region42: #{tpu_custom_call.1} parent=1 // pred_check
      _
    $region43: #{tpu_custom_call.1} parent=1 // pred_check_branch
      %120 = sbr.rel (0) target = $region45
    $region44: #{tpu_custom_call.1} parent=1 // pred_region
      %121 = dma.done [#allocation6], 16384
    $region45: #{tpu_custom_call.1} parent=1 // pred_fallthru
      _
    // Predicated region
    $region46: #{tpu_custom_call.1} parent=1 // pred_check
      _
    $region47: #{tpu_custom_call.1} parent=1 // pred_check_branch
      %123 = sbr.rel (0) target = $region49
    $region48: #{tpu_custom_call.1} parent=1 // pred_region
      %124 = dma.done [#allocation6], 32
    $region49: #{tpu_custom_call.1} parent=1 // pred_fallthru
      _
    // Predicated region
    $region50: #{tpu_custom_call.1} parent=1 // pred_check
      _
    $region51: #{tpu_custom_call.1} parent=1 // pred_check_branch
      %126 = sbr.rel (0) target = $region53
    $region52: #{tpu_custom_call.1} parent=1 // pred_region
      %127 = dma.done [#allocation9], 2048
    $region53: #{tpu_custom_call.1} parent=1 // pred_fallthru
      _
    // Predicated region
    $region54: #{tpu_custom_call.1} parent=1 // pred_check
      _
    $region55: #{tpu_custom_call.1} parent=1 // pred_check_branch
      %129 = sbr.rel (0) target = $region57
    $region56: #{tpu_custom_call.1} parent=1 // pred_region
      %130 = dma.done [#allocation9], 16
    $region57: #{tpu_custom_call.1} parent=1 // pred_fallthru
      _
    // Predicated region
    $region58: #{tpu_custom_call.1} parent=1 // pred_check
      _
    $region59: #{tpu_custom_call.1} parent=1 // pred_check_branch
      %132 = sbr.rel (0) target = $region61
    $region60: #{tpu_custom_call.1} parent=1 // pred_region
      %133 = dma.done [#allocation12], 1024
    $region61: #{tpu_custom_call.1} parent=1 // pred_fallthru
      _
    // Predicated region
    $region62: #{tpu_custom_call.1} parent=1 // pred_check
      _
    $region63: #{tpu_custom_call.1} parent=1 // pred_check_branch
      %135 = sbr.rel (0) target = $region65
    $region64: #{tpu_custom_call.1} parent=1 // pred_region
      %136 = dma.done [#allocation12], 16
    $region65: #{tpu_custom_call.1} parent=1 // pred_fallthru
      _
    // Predicated region
    $region66: #{tpu_custom_call.1} parent=1 // pred_check
      _
    $region67: #{tpu_custom_call.1} parent=1 // pred_check_branch
      %138 = sbr.rel (0) target = $region69
    $region68: #{tpu_custom_call.1} parent=1 // pred_region
      %139 = dma.done [#allocation15], 256
    $region69: #{tpu_custom_call.1} parent=1 // pred_fallthru
      _
    // Predicated region
    $region70: #{tpu_custom_call.1} parent=1 // pred_check
      _
    $region71: #{tpu_custom_call.1} parent=1 // pred_check_branch
      %141 = sbr.rel (0) target = $region73
    $region72: #{tpu_custom_call.1} parent=1 // pred_region
      %142 = dma.done [#allocation15], 128
    $region73: #{tpu_custom_call.1} parent=1 // pred_fallthru
      _
    %v144 = vld [vmem:[#allocation2] sm:$0xff]
    %v145 = vld [vmem:[#allocation2 + $0x8] sm:$0xff]
    %v146 = vld [vmem:[#allocation2 + $0x10] sm:$0xff]
    %v147 = vld [vmem:[#allocation2 + $0x18] sm:$0xff]
    %v148 = vld [vmem:[#allocation5] sm:$0xff]
    %v149 = vld [vmem:[#allocation5 + $0x8] sm:$0xff]
    %v150 = vld [vmem:[#allocation5 + $0x10] sm:$0xff]
    %v151 = vld [vmem:[#allocation5 + $0x18] sm:$0xff]
    %v152 = vld [vmem:[#allocation5 + $0x20] sm:$0xff]
    %v153 = vld [vmem:[#allocation5 + $0x28] sm:$0xff]
    %v154 = vld [vmem:[#allocation5 + $0x30] sm:$0xff]
    %v155 = vld [vmem:[#allocation5 + $0x38] sm:$0xff]
    %v156 = vld [vmem:[#allocation5 + $0x40] sm:$0xff]
    %v157 = vld [vmem:[#allocation5 + $0x48] sm:$0xff]
    %v158 = vld [vmem:[#allocation5 + $0x50] sm:$0xff]
    %v159 = vld [vmem:[#allocation5 + $0x58] sm:$0xff]
    %v160 = vld [vmem:[#allocation5 + $0x60] sm:$0xff]
    %v161 = vld [vmem:[#allocation5 + $0x68] sm:$0xff]
    %v162 = vld [vmem:[#allocation5 + $0x70] sm:$0xff]
    %v163 = vld [vmem:[#allocation5 + $0x78] sm:$0xff]
    %v164 = vld [vmem:[#allocation5 + $0x80] sm:$0xff]
    %v165 = vld [vmem:[#allocation5 + $0x88] sm:$0xff]
    %v166 = vld [vmem:[#allocation5 + $0x90] sm:$0xff]
    %v167 = vld [vmem:[#allocation5 + $0x98] sm:$0xff]
    %v168 = vld [vmem:[#allocation5 + $0xa0] sm:$0xff]
    %v169 = vld [vmem:[#allocation5 + $0xa8] sm:$0xff]
    %v170 = vld [vmem:[#allocation5 + $0xb0] sm:$0xff]
    %v171 = vld [vmem:[#allocation5 + $0xb8] sm:$0xff]
    %v172 = vld [vmem:[#allocation5 + $0xc0] sm:$0xff]
    %v173 = vld [vmem:[#allocation5 + $0xc8] sm:$0xff]
    %v174 = vld [vmem:[#allocation5 + $0xd0] sm:$0xff]
    %v175 = vld [vmem:[#allocation5 + $0xd8] sm:$0xff]
    %v176 = vld [vmem:[#allocation5 + $0xe0] sm:$0xff]
    %v177 = vld [vmem:[#allocation5 + $0xe8] sm:$0xff]
    %v178 = vld [vmem:[#allocation5 + $0xf0] sm:$0xff]
    %v179 = vld [vmem:[#allocation5 + $0xf8] sm:$0xff]
    %v180 = vld [vmem:[#allocation5 + $0x100] sm:$0xff]
    %v181 = vld [vmem:[#allocation5 + $0x108] sm:$0xff]
    %v182 = vld [vmem:[#allocation5 + $0x110] sm:$0xff]
    %v183 = vld [vmem:[#allocation5 + $0x118] sm:$0xff]
    %v184 = vld [vmem:[#allocation5 + $0x120] sm:$0xff]
    %v185 = vld [vmem:[#allocation5 + $0x128] sm:$0xff]
    %v186 = vld [vmem:[#allocation5 + $0x130] sm:$0xff]
    %v187 = vld [vmem:[#allocation5 + $0x138] sm:$0xff]
    %v188 = vld [vmem:[#allocation5 + $0x140] sm:$0xff]
    %v189 = vld [vmem:[#allocation5 + $0x148] sm:$0xff]
    %v190 = vld [vmem:[#allocation5 + $0x150] sm:$0xff]
    %v191 = vld [vmem:[#allocation5 + $0x158] sm:$0xff]
    %v192 = vld [vmem:[#allocation5 + $0x160] sm:$0xff]
    %v193 = vld [vmem:[#allocation5 + $0x168] sm:$0xff]
    %v194 = vld [vmem:[#allocation5 + $0x170] sm:$0xff]
    %v195 = vld [vmem:[#allocation5 + $0x178] sm:$0xff]
    %v196 = vld [vmem:[#allocation5 + $0x180] sm:$0xff]
    %v197 = vld [vmem:[#allocation5 + $0x188] sm:$0xff]
    %v198 = vld [vmem:[#allocation5 + $0x190] sm:$0xff]
    %v199 = vld [vmem:[#allocation5 + $0x198] sm:$0xff]
    %v200 = vld [vmem:[#allocation5 + $0x1a0] sm:$0xff]
    %v201 = vld [vmem:[#allocation5 + $0x1a8] sm:$0xff]
    %v202 = vld [vmem:[#allocation5 + $0x1b0] sm:$0xff]
    %v203 = vld [vmem:[#allocation5 + $0x1b8] sm:$0xff]
    %v204 = vld [vmem:[#allocation5 + $0x1c0] sm:$0xff]
    %v205 = vld [vmem:[#allocation5 + $0x1c8] sm:$0xff]
    %v206 = vld [vmem:[#allocation5 + $0x1d0] sm:$0xff]
    %v207 = vld [vmem:[#allocation5 + $0x1d8] sm:$0xff]
    %v208 = vld [vmem:[#allocation5 + $0x1e0] sm:$0xff]
    %v209 = vld [vmem:[#allocation5 + $0x1e8] sm:$0xff]
    %v210 = vld [vmem:[#allocation5 + $0x1f0] sm:$0xff]
    %v211 = vld [vmem:[#allocation5 + $0x1f8] sm:$0xff]
    %v212 = vld [vmem:[#allocation5 + $0x200] sm:$0xff]
    %v213 = vld [vmem:[#allocation5 + $0x208] sm:$0xff]
    %v214 = vld [vmem:[#allocation5 + $0x210] sm:$0xff]
    %v215 = vld [vmem:[#allocation5 + $0x218] sm:$0xff]
    %v216 = vld [vmem:[#allocation5 + $0x220] sm:$0xff]
    %v217 = vld [vmem:[#allocation5 + $0x228] sm:$0xff]
    %v218 = vld [vmem:[#allocation5 + $0x230] sm:$0xff]
    %v219 = vld [vmem:[#allocation5 + $0x238] sm:$0xff]
    %v220 = vld [vmem:[#allocation5 + $0x240] sm:$0xff]
    %v221 = vld [vmem:[#allocation5 + $0x248] sm:$0xff]
    %v222 = vld [vmem:[#allocation5 + $0x250] sm:$0xff]
    %v223 = vld [vmem:[#allocation5 + $0x258] sm:$0xff]
    %v224 = vld [vmem:[#allocation5 + $0x260] sm:$0xff]
    %v225 = vld [vmem:[#allocation5 + $0x268] sm:$0xff]
    %v226 = vld [vmem:[#allocation5 + $0x270] sm:$0xff]
    %v227 = vld [vmem:[#allocation5 + $0x278] sm:$0xff]
    %v228 = vld [vmem:[#allocation5 + $0x280] sm:$0xff]
    %v229 = vld [vmem:[#allocation5 + $0x288] sm:$0xff]
    %v230 = vld [vmem:[#allocation5 + $0x290] sm:$0xff]
    %v231 = vld [vmem:[#allocation5 + $0x298] sm:$0xff]
    %v232 = vld [vmem:[#allocation5 + $0x2a0] sm:$0xff]
    %v233 = vld [vmem:[#allocation5 + $0x2a8] sm:$0xff]
    %v234 = vld [vmem:[#allocation5 + $0x2b0] sm:$0xff]
    %v235 = vld [vmem:[#allocation5 + $0x2b8] sm:$0xff]
    %v236 = vld [vmem:[#allocation5 + $0x2c0] sm:$0xff]
    %v237 = vld [vmem:[#allocation5 + $0x2c8] sm:$0xff]
    %v238 = vld [vmem:[#allocation5 + $0x2d0] sm:$0xff]
    %v239 = vld [vmem:[#allocation5 + $0x2d8] sm:$0xff]
    %v240 = vld [vmem:[#allocation5 + $0x2e0] sm:$0xff]
    %v241 = vld [vmem:[#allocation5 + $0x2e8] sm:$0xff]
    %v242 = vld [vmem:[#allocation5 + $0x2f0] sm:$0xff]
    %v243 = vld [vmem:[#allocation5 + $0x2f8] sm:$0xff]
    %v244 = vld [vmem:[#allocation5 + $0x300] sm:$0xff]
    %v245 = vld [vmem:[#allocation5 + $0x308] sm:$0xff]
    %v246 = vld [vmem:[#allocation5 + $0x310] sm:$0xff]
    %v247 = vld [vmem:[#allocation5 + $0x318] sm:$0xff]
    %v248 = vld [vmem:[#allocation5 + $0x320] sm:$0xff]
    %v249 = vld [vmem:[#allocation5 + $0x328] sm:$0xff]
    %v250 = vld [vmem:[#allocation5 + $0x330] sm:$0xff]
    %v251 = vld [vmem:[#allocation5 + $0x338] sm:$0xff]
    %v252 = vld [vmem:[#allocation5 + $0x340] sm:$0xff]
    %v253 = vld [vmem:[#allocation5 + $0x348] sm:$0xff]
    %v254 = vld [vmem:[#allocation5 + $0x350] sm:$0xff]
    %v255 = vld [vmem:[#allocation5 + $0x358] sm:$0xff]
    %v256 = vld [vmem:[#allocation5 + $0x360] sm:$0xff]
    %v257 = vld [vmem:[#allocation5 + $0x368] sm:$0xff]
    %v258 = vld [vmem:[#allocation5 + $0x370] sm:$0xff]
    %v259 = vld [vmem:[#allocation5 + $0x378] sm:$0xff]
    %v260 = vld [vmem:[#allocation5 + $0x380] sm:$0xff]
    %v261 = vld [vmem:[#allocation5 + $0x388] sm:$0xff]
    %v262 = vld [vmem:[#allocation5 + $0x390] sm:$0xff]
    %v263 = vld [vmem:[#allocation5 + $0x398] sm:$0xff]
    %v264 = vld [vmem:[#allocation5 + $0x3a0] sm:$0xff]
    %v265 = vld [vmem:[#allocation5 + $0x3a8] sm:$0xff]
    %v266 = vld [vmem:[#allocation5 + $0x3b0] sm:$0xff]
    %v267 = vld [vmem:[#allocation5 + $0x3b8] sm:$0xff]
    %v268 = vld [vmem:[#allocation5 + $0x3c0] sm:$0xff]
    %v269 = vld [vmem:[#allocation5 + $0x3c8] sm:$0xff]
    %v270 = vld [vmem:[#allocation5 + $0x3d0] sm:$0xff]
    %v271 = vld [vmem:[#allocation5 + $0x3d8] sm:$0xff]
    %v272 = vld [vmem:[#allocation5 + $0x3e0] sm:$0xff]
    %v273 = vld [vmem:[#allocation5 + $0x3e8] sm:$0xff]
    %v274 = vld [vmem:[#allocation5 + $0x3f0] sm:$0xff]
    %v275 = vld [vmem:[#allocation5 + $0x3f8] sm:$0xff]
    %v276 = vld [vmem:[#allocation7] sm:$0x3]
    %v278 = vlaneseq
    %v279 = vshrl.u32 %v278, 7
    %v280 = vsub.s32 0, %v279
    %v281 = vrot.slane %v276, %v280
    %v282 = vlaneseq
    %v283 = vshrl.u32 %v282, 7
    %v284 = vsub.s32 1, %v283
    %v285 = vrot.slane %v276, %v284
    %v292 = vunpack.c.l.b16 %v144
    %v293 = vunpack.c.h.b16 %v144
    %v294 = vunpack.c.l.b16 %v145
    %v295 = vunpack.c.h.b16 %v145
    %v296 = vunpack.c.l.b16 %v146
    %v297 = vunpack.c.h.b16 %v146
    %v298 = vunpack.c.l.b16 %v147
    %v299 = vunpack.c.h.b16 %v147
    %v300 = vpack.c.b16 %v292, %v292
    %v301 = vpack.c.b16 %v293, %v293
    %v302 = vpack.c.b16 %v294, %v294
    %v303 = vpack.c.b16 %v295, %v295
    %v304 = vpack.c.b16 %v296, %v296
    %v305 = vpack.c.b16 %v297, %v297
    %v306 = vpack.c.b16 %v298, %v298
    %v307 = vpack.c.b16 %v299, %v299
    %v444 = vunpack.c.l.b16 %v148
    %v445 = vunpack.c.h.b16 %v148
    %v446 = vunpack.c.l.b16 %v149
    %v447 = vunpack.c.h.b16 %v149
    %v448 = vunpack.c.l.b16 %v150
    %v449 = vunpack.c.h.b16 %v150
    %v450 = vunpack.c.l.b16 %v151
    %v451 = vunpack.c.h.b16 %v151
    %v452 = vunpack.c.l.b16 %v152
    %v453 = vunpack.c.h.b16 %v152
    %v454 = vunpack.c.l.b16 %v153
    %v455 = vunpack.c.h.b16 %v153
    %v456 = vunpack.c.l.b16 %v154
    %v457 = vunpack.c.h.b16 %v154
    %v458 = vunpack.c.l.b16 %v155
    %v459 = vunpack.c.h.b16 %v155
    %v460 = vunpack.c.l.b16 %v156
    %v461 = vunpack.c.h.b16 %v156
    %v462 = vunpack.c.l.b16 %v157
    %v463 = vunpack.c.h.b16 %v157
    %v464 = vunpack.c.l.b16 %v158
    %v465 = vunpack.c.h.b16 %v158
    %v466 = vunpack.c.l.b16 %v159
    %v467 = vunpack.c.h.b16 %v159
    %v468 = vunpack.c.l.b16 %v160
    %v469 = vunpack.c.h.b16 %v160
    %v470 = vunpack.c.l.b16 %v161
    %v471 = vunpack.c.h.b16 %v161
    %v472 = vunpack.c.l.b16 %v162
    %v473 = vunpack.c.h.b16 %v162
    %v474 = vunpack.c.l.b16 %v163
    %v475 = vunpack.c.h.b16 %v163
    %v476 = vunpack.c.l.b16 %v164
    %v477 = vunpack.c.h.b16 %v164
    %v478 = vunpack.c.l.b16 %v165
    %v479 = vunpack.c.h.b16 %v165
    %v480 = vunpack.c.l.b16 %v166
    %v481 = vunpack.c.h.b16 %v166
    %v482 = vunpack.c.l.b16 %v167
    %v483 = vunpack.c.h.b16 %v167
    %v484 = vunpack.c.l.b16 %v168
    %v485 = vunpack.c.h.b16 %v168
    %v486 = vunpack.c.l.b16 %v169
    %v487 = vunpack.c.h.b16 %v169
    %v488 = vunpack.c.l.b16 %v170
    %v489 = vunpack.c.h.b16 %v170
    %v490 = vunpack.c.l.b16 %v171
    %v491 = vunpack.c.h.b16 %v171
    %v492 = vunpack.c.l.b16 %v172
    %v493 = vunpack.c.h.b16 %v172
    %v494 = vunpack.c.l.b16 %v173
    %v495 = vunpack.c.h.b16 %v173
    %v496 = vunpack.c.l.b16 %v174
    %v497 = vunpack.c.h.b16 %v174
    %v498 = vunpack.c.l.b16 %v175
    %v499 = vunpack.c.h.b16 %v175
    %v500 = vunpack.c.l.b16 %v176
    %v501 = vunpack.c.h.b16 %v176
    %v502 = vunpack.c.l.b16 %v177
    %v503 = vunpack.c.h.b16 %v177
    %v504 = vunpack.c.l.b16 %v178
    %v505 = vunpack.c.h.b16 %v178
    %v506 = vunpack.c.l.b16 %v179
    %v507 = vunpack.c.h.b16 %v179
    %v508 = vunpack.c.l.b16 %v180
    %v509 = vunpack.c.h.b16 %v180
    %v510 = vunpack.c.l.b16 %v181
    %v511 = vunpack.c.h.b16 %v181
    %v512 = vunpack.c.l.b16 %v182
    %v513 = vunpack.c.h.b16 %v182
    %v514 = vunpack.c.l.b16 %v183
    %v515 = vunpack.c.h.b16 %v183
    %v516 = vunpack.c.l.b16 %v184
    %v517 = vunpack.c.h.b16 %v184
    %v518 = vunpack.c.l.b16 %v185
    %v519 = vunpack.c.h.b16 %v185
    %v520 = vunpack.c.l.b16 %v186
    %v521 = vunpack.c.h.b16 %v186
    %v522 = vunpack.c.l.b16 %v187
    %v523 = vunpack.c.h.b16 %v187
    %v524 = vunpack.c.l.b16 %v188
    %v525 = vunpack.c.h.b16 %v188
    %v526 = vunpack.c.l.b16 %v189
    %v527 = vunpack.c.h.b16 %v189
    %v528 = vunpack.c.l.b16 %v190
    %v529 = vunpack.c.h.b16 %v190
    %v530 = vunpack.c.l.b16 %v191
    %v531 = vunpack.c.h.b16 %v191
    %v532 = vunpack.c.l.b16 %v192
    %v533 = vunpack.c.h.b16 %v192
    %v534 = vunpack.c.l.b16 %v193
    %v535 = vunpack.c.h.b16 %v193
    %v536 = vunpack.c.l.b16 %v194
    %v537 = vunpack.c.h.b16 %v194
    %v538 = vunpack.c.l.b16 %v195
    %v539 = vunpack.c.h.b16 %v195
    %v540 = vunpack.c.l.b16 %v196
    %v541 = vunpack.c.h.b16 %v196
    %v542 = vunpack.c.l.b16 %v197
    %v543 = vunpack.c.h.b16 %v197
    %v544 = vunpack.c.l.b16 %v198
    %v545 = vunpack.c.h.b16 %v198
    %v546 = vunpack.c.l.b16 %v199
    %v547 = vunpack.c.h.b16 %v199
    %v548 = vunpack.c.l.b16 %v200
    %v549 = vunpack.c.h.b16 %v200
    %v550 = vunpack.c.l.b16 %v201
    %v551 = vunpack.c.h.b16 %v201
    %v552 = vunpack.c.l.b16 %v202
    %v553 = vunpack.c.h.b16 %v202
    %v554 = vunpack.c.l.b16 %v203
    %v555 = vunpack.c.h.b16 %v203
    %v556 = vunpack.c.l.b16 %v204
    %v557 = vunpack.c.h.b16 %v204
    %v558 = vunpack.c.l.b16 %v205
    %v559 = vunpack.c.h.b16 %v205
    %v560 = vunpack.c.l.b16 %v206
    %v561 = vunpack.c.h.b16 %v206
    %v562 = vunpack.c.l.b16 %v207
    %v563 = vunpack.c.h.b16 %v207
    %v564 = vunpack.c.l.b16 %v208
    %v565 = vunpack.c.h.b16 %v208
    %v566 = vunpack.c.l.b16 %v209
    %v567 = vunpack.c.h.b16 %v209
    %v568 = vunpack.c.l.b16 %v210
    %v569 = vunpack.c.h.b16 %v210
    %v570 = vunpack.c.l.b16 %v211
    %v571 = vunpack.c.h.b16 %v211
    %v572 = vunpack.c.l.b16 %v212
    %v573 = vunpack.c.h.b16 %v212
    %v574 = vunpack.c.l.b16 %v213
    %v575 = vunpack.c.h.b16 %v213
    %v576 = vunpack.c.l.b16 %v214
    %v577 = vunpack.c.h.b16 %v214
    %v578 = vunpack.c.l.b16 %v215
    %v579 = vunpack.c.h.b16 %v215
    %v580 = vunpack.c.l.b16 %v216
    %v581 = vunpack.c.h.b16 %v216
    %v582 = vunpack.c.l.b16 %v217
    %v583 = vunpack.c.h.b16 %v217
    %v584 = vunpack.c.l.b16 %v218
    %v585 = vunpack.c.h.b16 %v218
    %v586 = vunpack.c.l.b16 %v219
    %v587 = vunpack.c.h.b16 %v219
    %v588 = vunpack.c.l.b16 %v220
    %v589 = vunpack.c.h.b16 %v220
    %v590 = vunpack.c.l.b16 %v221
    %v591 = vunpack.c.h.b16 %v221
    %v592 = vunpack.c.l.b16 %v222
    %v593 = vunpack.c.h.b16 %v222
    %v594 = vunpack.c.l.b16 %v223
    %v595 = vunpack.c.h.b16 %v223
    %v596 = vunpack.c.l.b16 %v224
    %v597 = vunpack.c.h.b16 %v224
    %v598 = vunpack.c.l.b16 %v225
    %v599 = vunpack.c.h.b16 %v225
    %v600 = vunpack.c.l.b16 %v226
    %v601 = vunpack.c.h.b16 %v226
    %v602 = vunpack.c.l.b16 %v227
    %v603 = vunpack.c.h.b16 %v227
    %v604 = vunpack.c.l.b16 %v228
    %v605 = vunpack.c.h.b16 %v228
    %v606 = vunpack.c.l.b16 %v229
    %v607 = vunpack.c.h.b16 %v229
    %v608 = vunpack.c.l.b16 %v230
    %v609 = vunpack.c.h.b16 %v230
    %v610 = vunpack.c.l.b16 %v231
    %v611 = vunpack.c.h.b16 %v231
    %v612 = vunpack.c.l.b16 %v232
    %v613 = vunpack.c.h.b16 %v232
    %v614 = vunpack.c.l.b16 %v233
    %v615 = vunpack.c.h.b16 %v233
    %v616 = vunpack.c.l.b16 %v234
    %v617 = vunpack.c.h.b16 %v234
    %v618 = vunpack.c.l.b16 %v235
    %v619 = vunpack.c.h.b16 %v235
    %v620 = vunpack.c.l.b16 %v236
    %v621 = vunpack.c.h.b16 %v236
    %v622 = vunpack.c.l.b16 %v237
    %v623 = vunpack.c.h.b16 %v237
    %v624 = vunpack.c.l.b16 %v238
    %v625 = vunpack.c.h.b16 %v238
    %v626 = vunpack.c.l.b16 %v239
    %v627 = vunpack.c.h.b16 %v239
    %v628 = vunpack.c.l.b16 %v240
    %v629 = vunpack.c.h.b16 %v240
    %v630 = vunpack.c.l.b16 %v241
    %v631 = vunpack.c.h.b16 %v241
    %v632 = vunpack.c.l.b16 %v242
    %v633 = vunpack.c.h.b16 %v242
    %v634 = vunpack.c.l.b16 %v243
    %v635 = vunpack.c.h.b16 %v243
    %v636 = vunpack.c.l.b16 %v244
    %v637 = vunpack.c.h.b16 %v244
    %v638 = vunpack.c.l.b16 %v245
    %v639 = vunpack.c.h.b16 %v245
    %v640 = vunpack.c.l.b16 %v246
    %v641 = vunpack.c.h.b16 %v246
    %v642 = vunpack.c.l.b16 %v247
    %v643 = vunpack.c.h.b16 %v247
    %v644 = vunpack.c.l.b16 %v248
    %v645 = vunpack.c.h.b16 %v248
    %v646 = vunpack.c.l.b16 %v249
    %v647 = vunpack.c.h.b16 %v249
    %v648 = vunpack.c.l.b16 %v250
    %v649 = vunpack.c.h.b16 %v250
    %v650 = vunpack.c.l.b16 %v251
    %v651 = vunpack.c.h.b16 %v251
    %v652 = vunpack.c.l.b16 %v252
    %v653 = vunpack.c.h.b16 %v252
    %v654 = vunpack.c.l.b16 %v253
    %v655 = vunpack.c.h.b16 %v253
    %v656 = vunpack.c.l.b16 %v254
    %v657 = vunpack.c.h.b16 %v254
    %v658 = vunpack.c.l.b16 %v255
    %v659 = vunpack.c.h.b16 %v255
    %v660 = vunpack.c.l.b16 %v256
    %v661 = vunpack.c.h.b16 %v256
    %v662 = vunpack.c.l.b16 %v257
    %v663 = vunpack.c.h.b16 %v257
    %v664 = vunpack.c.l.b16 %v258
    %v665 = vunpack.c.h.b16 %v258
    %v666 = vunpack.c.l.b16 %v259
    %v667 = vunpack.c.h.b16 %v259
    %v668 = vunpack.c.l.b16 %v260
    %v669 = vunpack.c.h.b16 %v260
    %v670 = vunpack.c.l.b16 %v261
    %v671 = vunpack.c.h.b16 %v261
    %v672 = vunpack.c.l.b16 %v262
    %v673 = vunpack.c.h.b16 %v262
    %v674 = vunpack.c.l.b16 %v263
    %v675 = vunpack.c.h.b16 %v263
    %v676 = vunpack.c.l.b16 %v264
    %v677 = vunpack.c.h.b16 %v264
    %v678 = vunpack.c.l.b16 %v265
    %v679 = vunpack.c.h.b16 %v265
    %v680 = vunpack.c.l.b16 %v266
    %v681 = vunpack.c.h.b16 %v266
    %v682 = vunpack.c.l.b16 %v267
    %v683 = vunpack.c.h.b16 %v267
    %v684 = vunpack.c.l.b16 %v268
    %v685 = vunpack.c.h.b16 %v268
    %v686 = vunpack.c.l.b16 %v269
    %v687 = vunpack.c.h.b16 %v269
    %v688 = vunpack.c.l.b16 %v270
    %v689 = vunpack.c.h.b16 %v270
    %v690 = vunpack.c.l.b16 %v271
    %v691 = vunpack.c.h.b16 %v271
    %v692 = vunpack.c.l.b16 %v272
    %v693 = vunpack.c.h.b16 %v272
    %v694 = vunpack.c.l.b16 %v273
    %v695 = vunpack.c.h.b16 %v273
    %v696 = vunpack.c.l.b16 %v274
    %v697 = vunpack.c.h.b16 %v274
    %v698 = vunpack.c.l.b16 %v275
    %v699 = vunpack.c.h.b16 %v275
    %v700 = vpack.c.b16 %v446, %v444
    %v701 = vpack.c.b16 %v447, %v445
    %v702 = vpack.c.b16 %v450, %v448
    %v703 = vpack.c.b16 %v451, %v449
    %v704 = vpack.c.b16 %v454, %v452
    %v705 = vpack.c.b16 %v455, %v453
    %v706 = vpack.c.b16 %v458, %v456
    %v707 = vpack.c.b16 %v459, %v457
    %v708 = vpack.c.b16 %v462, %v460
    %v709 = vpack.c.b16 %v463, %v461
    %v710 = vpack.c.b16 %v466, %v464
    %v711 = vpack.c.b16 %v467, %v465
    %v712 = vpack.c.b16 %v470, %v468
    %v713 = vpack.c.b16 %v471, %v469
    %v714 = vpack.c.b16 %v474, %v472
    %v715 = vpack.c.b16 %v475, %v473
    %v716 = vpack.c.b16 %v478, %v476
    %v717 = vpack.c.b16 %v479, %v477
    %v718 = vpack.c.b16 %v482, %v480
    %v719 = vpack.c.b16 %v483, %v481
    %v720 = vpack.c.b16 %v486, %v484
    %v721 = vpack.c.b16 %v487, %v485
    %v722 = vpack.c.b16 %v490, %v488
    %v723 = vpack.c.b16 %v491, %v489
    %v724 = vpack.c.b16 %v494, %v492
    %v725 = vpack.c.b16 %v495, %v493
    %v726 = vpack.c.b16 %v498, %v496
    %v727 = vpack.c.b16 %v499, %v497
    %v728 = vpack.c.b16 %v502, %v500
    %v729 = vpack.c.b16 %v503, %v501
    %v730 = vpack.c.b16 %v506, %v504
    %v731 = vpack.c.b16 %v507, %v505
    %v732 = vpack.c.b16 %v510, %v508
    %v733 = vpack.c.b16 %v511, %v509
    %v734 = vpack.c.b16 %v514, %v512
    %v735 = vpack.c.b16 %v515, %v513
    %v736 = vpack.c.b16 %v518, %v516
    %v737 = vpack.c.b16 %v519, %v517
    %v738 = vpack.c.b16 %v522, %v520
    %v739 = vpack.c.b16 %v523, %v521
    %v740 = vpack.c.b16 %v526, %v524
    %v741 = vpack.c.b16 %v527, %v525
    %v742 = vpack.c.b16 %v530, %v528
    %v743 = vpack.c.b16 %v531, %v529
    %v744 = vpack.c.b16 %v534, %v532
    %v745 = vpack.c.b16 %v535, %v533
    %v746 = vpack.c.b16 %v538, %v536
    %v747 = vpack.c.b16 %v539, %v537
    %v748 = vpack.c.b16 %v542, %v540
    %v749 = vpack.c.b16 %v543, %v541
    %v750 = vpack.c.b16 %v546, %v544
    %v751 = vpack.c.b16 %v547, %v545
    %v752 = vpack.c.b16 %v550, %v548
    %v753 = vpack.c.b16 %v551, %v549
    %v754 = vpack.c.b16 %v554, %v552
    %v755 = vpack.c.b16 %v555, %v553
    %v756 = vpack.c.b16 %v558, %v556
    %v757 = vpack.c.b16 %v559, %v557
    %v758 = vpack.c.b16 %v562, %v560
    %v759 = vpack.c.b16 %v563, %v561
    %v760 = vpack.c.b16 %v566, %v564
    %v761 = vpack.c.b16 %v567, %v565
    %v762 = vpack.c.b16 %v570, %v568
    %v763 = vpack.c.b16 %v571, %v569
    %v764 = vpack.c.b16 %v574, %v572
    %v765 = vpack.c.b16 %v575, %v573
    %v766 = vpack.c.b16 %v578, %v576
    %v767 = vpack.c.b16 %v579, %v577
    %v768 = vpack.c.b16 %v582, %v580
    %v769 = vpack.c.b16 %v583, %v581
    %v770 = vpack.c.b16 %v586, %v584
    %v771 = vpack.c.b16 %v587, %v585
    %v772 = vpack.c.b16 %v590, %v588
    %v773 = vpack.c.b16 %v591, %v589
    %v774 = vpack.c.b16 %v594, %v592
    %v775 = vpack.c.b16 %v595, %v593
    %v776 = vpack.c.b16 %v598, %v596
    %v777 = vpack.c.b16 %v599, %v597
    %v778 = vpack.c.b16 %v602, %v600
    %v779 = vpack.c.b16 %v603, %v601
    %v780 = vpack.c.b16 %v606, %v604
    %v781 = vpack.c.b16 %v607, %v605
    %v782 = vpack.c.b16 %v610, %v608
    %v783 = vpack.c.b16 %v611, %v609
    %v784 = vpack.c.b16 %v614, %v612
    %v785 = vpack.c.b16 %v615, %v613
    %v786 = vpack.c.b16 %v618, %v616
    %v787 = vpack.c.b16 %v619, %v617
    %v788 = vpack.c.b16 %v622, %v620
    %v789 = vpack.c.b16 %v623, %v621
    %v790 = vpack.c.b16 %v626, %v624
    %v791 = vpack.c.b16 %v627, %v625
    %v792 = vpack.c.b16 %v630, %v628
    %v793 = vpack.c.b16 %v631, %v629
    %v794 = vpack.c.b16 %v634, %v632
    %v795 = vpack.c.b16 %v635, %v633
    %v796 = vpack.c.b16 %v638, %v636
    %v797 = vpack.c.b16 %v639, %v637
    %v798 = vpack.c.b16 %v642, %v640
    %v799 = vpack.c.b16 %v643, %v641
    %v800 = vpack.c.b16 %v646, %v644
    %v801 = vpack.c.b16 %v647, %v645
    %v802 = vpack.c.b16 %v650, %v648
    %v803 = vpack.c.b16 %v651, %v649
    %v804 = vpack.c.b16 %v654, %v652
    %v805 = vpack.c.b16 %v655, %v653
    %v806 = vpack.c.b16 %v658, %v656
    %v807 = vpack.c.b16 %v659, %v657
    %v808 = vpack.c.b16 %v662, %v660
    %v809 = vpack.c.b16 %v663, %v661
    %v810 = vpack.c.b16 %v666, %v664
    %v811 = vpack.c.b16 %v667, %v665
    %v812 = vpack.c.b16 %v670, %v668
    %v813 = vpack.c.b16 %v671, %v669
    %v814 = vpack.c.b16 %v674, %v672
    %v815 = vpack.c.b16 %v675, %v673
    %v816 = vpack.c.b16 %v678, %v676
    %v817 = vpack.c.b16 %v679, %v677
    %v818 = vpack.c.b16 %v682, %v680
    %v819 = vpack.c.b16 %v683, %v681
    %v820 = vpack.c.b16 %v686, %v684
    %v821 = vpack.c.b16 %v687, %v685
    %v822 = vpack.c.b16 %v690, %v688
    %v823 = vpack.c.b16 %v691, %v689
    %v824 = vpack.c.b16 %v694, %v692
    %v825 = vpack.c.b16 %v695, %v693
    %v826 = vpack.c.b16 %v698, %v696
    %v827 = vpack.c.b16 %v699, %v697
    %956 = vmatprep.subr.bf16.mxu0 %v701
    %957 = vmatpush1.bf16.msra.mxu0 %v700
    %958 = vmatprep.subr.bf16.mxu0 %v703
    %959 = vmatpush1.bf16.msra.mxu0 %v702
    %960 = vmatprep.subr.bf16.mxu0 %v705
    %961 = vmatpush1.bf16.msra.mxu0 %v704
    %962 = vmatprep.subr.bf16.mxu0 %v707
    %963 = vmatpush1.bf16.msra.mxu0 %v706
    %964 = vmatprep.subr.bf16.mxu0 %v709
    %965 = vmatpush1.bf16.msra.mxu0 %v708
    %966 = vmatprep.subr.bf16.mxu0 %v711
    %967 = vmatpush1.bf16.msra.mxu0 %v710
    %968 = vmatprep.subr.bf16.mxu0 %v713
    %969 = vmatpush1.bf16.msra.mxu0 %v712
    %970 = vmatprep.subr.bf16.mxu0 %v715
    %971 = vmatpush1.bf16.msra.mxu0 %v714
    %972 = vmatprep.subr.bf16.mxu0 %v717
    %973 = vmatpush1.bf16.msra.mxu0 %v716
    %974 = vmatprep.subr.bf16.mxu0 %v719
    %975 = vmatpush1.bf16.msra.mxu0 %v718
    %976 = vmatprep.subr.bf16.mxu0 %v721
    %977 = vmatpush1.bf16.msra.mxu0 %v720
    %978 = vmatprep.subr.bf16.mxu0 %v723
    %979 = vmatpush1.bf16.msra.mxu0 %v722
    %980 = vmatprep.subr.bf16.mxu0 %v725
    %981 = vmatpush1.bf16.msra.mxu0 %v724
    %982 = vmatprep.subr.bf16.mxu0 %v727
    %983 = vmatpush1.bf16.msra.mxu0 %v726
    %984 = vmatprep.subr.bf16.mxu0 %v729
    %985 = vmatpush1.bf16.msra.mxu0 %v728
    %986 = vmatprep.subr.bf16.mxu0 %v731
    %987 = vmatpush1.bf16.msra.mxu0 %v730
    %988 = vmatprep.mubr.bf16.mxu0 %v301
    %989 = vmatmul.mubr.bf16.gmra.mrb[0].mxu0 %v300
    %v990 = vpop.f32.mrb[0].mxu0
    %v991 = vadd.f32 %v281, %v990
    %v992 = vpop.f32.mrb[0].mxu0
    %v993 = vadd.f32 %v285, %v992
    %v994 = vpop.f32.mrb[0].mxu0
    %v995 = vpop.f32.mrb[0].mxu0
    %996 = vdwg.mxu0
    %997 = vmatprep.subr.bf16.mxu0 %v733
    %998 = vmatpush1.bf16.msra.mxu0 %v732
    %999 = vmatprep.subr.bf16.mxu0 %v735
    %1000 = vmatpush1.bf16.msra.mxu0 %v734
    %1001 = vmatprep.subr.bf16.mxu0 %v737
    %1002 = vmatpush1.bf16.msra.mxu0 %v736
    %1003 = vmatprep.subr.bf16.mxu0 %v739
    %1004 = vmatpush1.bf16.msra.mxu0 %v738
    %1005 = vmatprep.subr.bf16.mxu0 %v741
    %1006 = vmatpush1.bf16.msra.mxu0 %v740
    %1007 = vmatprep.subr.bf16.mxu0 %v743
    %1008 = vmatpush1.bf16.msra.mxu0 %v742
    %1009 = vmatprep.subr.bf16.mxu0 %v745
    %1010 = vmatpush1.bf16.msra.mxu0 %v744
    %1011 = vmatprep.subr.bf16.mxu0 %v747
    %1012 = vmatpush1.bf16.msra.mxu0 %v746
    %1013 = vmatprep.subr.bf16.mxu0 %v749
    %1014 = vmatpush1.bf16.msra.mxu0 %v748
    %1015 = vmatprep.subr.bf16.mxu0 %v751
    %1016 = vmatpush1.bf16.msra.mxu0 %v750
    %1017 = vmatprep.subr.bf16.mxu0 %v753
    %1018 = vmatpush1.bf16.msra.mxu0 %v752
    %1019 = vmatprep.subr.bf16.mxu0 %v755
    %1020 = vmatpush1.bf16.msra.mxu0 %v754
    %1021 = vmatprep.subr.bf16.mxu0 %v757
    %1022 = vmatpush1.bf16.msra.mxu0 %v756
    %1023 = vmatprep.subr.bf16.mxu0 %v759
    %1024 = vmatpush1.bf16.msra.mxu0 %v758
    %1025 = vmatprep.subr.bf16.mxu0 %v761
    %1026 = vmatpush1.bf16.msra.mxu0 %v760
    %1027 = vmatprep.subr.bf16.mxu0 %v763
    %1028 = vmatpush1.bf16.msra.mxu0 %v762
    %1029 = vmatprep.mubr.bf16.mxu0 %v303
    %1030 = vmatmul.mubr.bf16.gmra.mrb[0].mxu0 %v302
    %v1031 = vpop.f32.mrb[0].mxu0
    %v1032 = vadd.f32 %v991, %v1031
    %v1033 = vpop.f32.mrb[0].mxu0
    %v1034 = vadd.f32 %v993, %v1033
    %v1035 = vpop.f32.mrb[0].mxu0
    %v1036 = vpop.f32.mrb[0].mxu0
    %1037 = vdwg.mxu0
    %1038 = vmatprep.subr.bf16.mxu0 %v765
    %1039 = vmatpush1.bf16.msra.mxu0 %v764
    %1040 = vmatprep.subr.bf16.mxu0 %v767
    %1041 = vmatpush1.bf16.msra.mxu0 %v766
    %1042 = vmatprep.subr.bf16.mxu0 %v769
    %1043 = vmatpush1.bf16.msra.mxu0 %v768
    %1044 = vmatprep.subr.bf16.mxu0 %v771
    %1045 = vmatpush1.bf16.msra.mxu0 %v770
    %1046 = vmatprep.subr.bf16.mxu0 %v773
    %1047 = vmatpush1.bf16.msra.mxu0 %v772
    %1048 = vmatprep.subr.bf16.mxu0 %v775
    %1049 = vmatpush1.bf16.msra.mxu0 %v774
    %1050 = vmatprep.subr.bf16.mxu0 %v777
    %1051 = vmatpush1.bf16.msra.mxu0 %v776
    %1052 = vmatprep.subr.bf16.mxu0 %v779
    %1053 = vmatpush1.bf16.msra.mxu0 %v778
    %1054 = vmatprep.subr.bf16.mxu0 %v781
    %1055 = vmatpush1.bf16.msra.mxu0 %v780
    %1056 = vmatprep.subr.bf16.mxu0 %v783
    %1057 = vmatpush1.bf16.msra.mxu0 %v782
    %1058 = vmatprep.subr.bf16.mxu0 %v785
    %1059 = vmatpush1.bf16.msra.mxu0 %v784
    %1060 = vmatprep.subr.bf16.mxu0 %v787
    %1061 = vmatpush1.bf16.msra.mxu0 %v786
    %1062 = vmatprep.subr.bf16.mxu0 %v789
    %1063 = vmatpush1.bf16.msra.mxu0 %v788
    %1064 = vmatprep.subr.bf16.mxu0 %v791
    %1065 = vmatpush1.bf16.msra.mxu0 %v790
    %1066 = vmatprep.subr.bf16.mxu0 %v793
    %1067 = vmatpush1.bf16.msra.mxu0 %v792
    %1068 = vmatprep.subr.bf16.mxu0 %v795
    %1069 = vmatpush1.bf16.msra.mxu0 %v794
    %1070 = vmatprep.mubr.bf16.mxu0 %v305
    %1071 = vmatmul.mubr.bf16.gmra.mrb[0].mxu0 %v304
    %v1072 = vpop.f32.mrb[0].mxu0
    %v1073 = vadd.f32 %v1032, %v1072
    %v1074 = vpop.f32.mrb[0].mxu0
    %v1075 = vadd.f32 %v1034, %v1074
    %v1076 = vpop.f32.mrb[0].mxu0
    %v1077 = vpop.f32.mrb[0].mxu0
    %1078 = vdwg.mxu0
    %1079 = vmatprep.subr.bf16.mxu0 %v797
    %1080 = vmatpush1.bf16.msra.mxu0 %v796
    %1081 = vmatprep.subr.bf16.mxu0 %v799
    %1082 = vmatpush1.bf16.msra.mxu0 %v798
    %1083 = vmatprep.subr.bf16.mxu0 %v801
    %1084 = vmatpush1.bf16.msra.mxu0 %v800
    %1085 = vmatprep.subr.bf16.mxu0 %v803
    %1086 = vmatpush1.bf16.msra.mxu0 %v802
    %1087 = vmatprep.subr.bf16.mxu0 %v805
    %1088 = vmatpush1.bf16.msra.mxu0 %v804
    %1089 = vmatprep.subr.bf16.mxu0 %v807
    %1090 = vmatpush1.bf16.msra.mxu0 %v806
    %1091 = vmatprep.subr.bf16.mxu0 %v809
    %1092 = vmatpush1.bf16.msra.mxu0 %v808
    %1093 = vmatprep.subr.bf16.mxu0 %v811
    %1094 = vmatpush1.bf16.msra.mxu0 %v810
    %1095 = vmatprep.subr.bf16.mxu0 %v813
    %1096 = vmatpush1.bf16.msra.mxu0 %v812
    %1097 = vmatprep.subr.bf16.mxu0 %v815
    %1098 = vmatpush1.bf16.msra.mxu0 %v814
    %1099 = vmatprep.subr.bf16.mxu0 %v817
    %1100 = vmatpush1.bf16.msra.mxu0 %v816
    %1101 = vmatprep.subr.bf16.mxu0 %v819
    %1102 = vmatpush1.bf16.msra.mxu0 %v818
    %1103 = vmatprep.subr.bf16.mxu0 %v821
    %1104 = vmatpush1.bf16.msra.mxu0 %v820
    %1105 = vmatprep.subr.bf16.mxu0 %v823
    %1106 = vmatpush1.bf16.msra.mxu0 %v822
    %1107 = vmatprep.subr.bf16.mxu0 %v825
    %1108 = vmatpush1.bf16.msra.mxu0 %v824
    %1109 = vmatprep.subr.bf16.mxu0 %v827
    %1110 = vmatpush1.bf16.msra.mxu0 %v826
    %1111 = vmatprep.mubr.bf16.mxu0 %v307
    %1112 = vmatmul.mubr.bf16.gmra.mrb[0].mxu0 %v306
    %v1113 = vpop.f32.mrb[0].mxu0
    %v1114 = vadd.f32 %v1073, %v1113
    %v1115 = vpop.f32.mrb[0].mxu0
    %v1116 = vadd.f32 %v1075, %v1115
    %v1117 = vpop.f32.mrb[0].mxu0
    %v1118 = vpop.f32.mrb[0].mxu0
    %1119 = vdwg.mxu0
    %v1120 = vmax.f32 %v1114, 0.0
    %v1121 = vmax.f32 %v1116, 0.0
    %v1122 = vld [vmem:[#allocation14] sm:$0xff]
    %v1123 = vld [vmem:[#allocation14 + $0x8] sm:$0xff]
    %vm1124 = vcmp.ge.f32.partialorder %v1122, 0.2
    %vm1125 = vcmp.ge.f32.partialorder %v1123, 0.2
    %v1126 = vmul.f32 %v1120, 1.25
    %v1127 = vmul.f32 %v1121, 1.25
    %v1128 = vsel %vm1124, %v1126, 0.0
    %v1129 = vsel %vm1125, %v1127, 0.0
    %v1130 = vpack.c.bf16 %v1128, %v1128
    %v1131 = vpack.c.bf16 %v1129, %v1129
    %v1132 = vld [vmem:[#allocation8] sm:$0xf]
    %v1133 = vld [vmem:[#allocation8 + $0x4] sm:$0xf]
    %v1134 = vld [vmem:[#allocation8 + $0x8] sm:$0xf]
    %v1135 = vld [vmem:[#allocation8 + $0xc] sm:$0xf]
    %v1136 = vld [vmem:[#allocation8 + $0x10] sm:$0xf]
    %v1137 = vld [vmem:[#allocation8 + $0x14] sm:$0xf]
    %v1138 = vld [vmem:[#allocation8 + $0x18] sm:$0xf]
    %v1139 = vld [vmem:[#allocation8 + $0x1c] sm:$0xf]
    %v1140 = vld [vmem:[#allocation8 + $0x20] sm:$0xf]
    %v1141 = vld [vmem:[#allocation8 + $0x24] sm:$0xf]
    %v1142 = vld [vmem:[#allocation8 + $0x28] sm:$0xf]
    %v1143 = vld [vmem:[#allocation8 + $0x2c] sm:$0xf]
    %v1144 = vld [vmem:[#allocation8 + $0x30] sm:$0xf]
    %v1145 = vld [vmem:[#allocation8 + $0x34] sm:$0xf]
    %v1146 = vld [vmem:[#allocation8 + $0x38] sm:$0xf]
    %v1147 = vld [vmem:[#allocation8 + $0x3c] sm:$0xf]
    %v1148 = vld [vmem:[#allocation8 + $0x40] sm:$0xf]
    %v1149 = vld [vmem:[#allocation8 + $0x44] sm:$0xf]
    %v1150 = vld [vmem:[#allocation8 + $0x48] sm:$0xf]
    %v1151 = vld [vmem:[#allocation8 + $0x4c] sm:$0xf]
    %v1152 = vld [vmem:[#allocation8 + $0x50] sm:$0xf]
    %v1153 = vld [vmem:[#allocation8 + $0x54] sm:$0xf]
    %v1154 = vld [vmem:[#allocation8 + $0x58] sm:$0xf]
    %v1155 = vld [vmem:[#allocation8 + $0x5c] sm:$0xf]
    %v1156 = vld [vmem:[#allocation8 + $0x60] sm:$0xf]
    %v1157 = vld [vmem:[#allocation8 + $0x64] sm:$0xf]
    %v1158 = vld [vmem:[#allocation8 + $0x68] sm:$0xf]
    %v1159 = vld [vmem:[#allocation8 + $0x6c] sm:$0xf]
    %v1160 = vld [vmem:[#allocation8 + $0x70] sm:$0xf]
    %v1161 = vld [vmem:[#allocation8 + $0x74] sm:$0xf]
    %v1162 = vld [vmem:[#allocation8 + $0x78] sm:$0xf]
    %v1163 = vld [vmem:[#allocation8 + $0x7c] sm:$0xf]
    %v1164 = vld [vmem:[#allocation10] sm:$0x1]
    %v1166 = vlaneseq
    %v1167 = vshrl.u32 %v1166, 7
    %v1168 = vsub.s32 0, %v1167
    %v1169 = vrot.slane %v1164, %v1168
    %v1203 = vunpack.c.l.b16 %v1132
    %v1204 = vunpack.c.l.b16 %v1133
    %v1205 = vunpack.c.l.b16 %v1134
    %v1206 = vunpack.c.l.b16 %v1135
    %v1207 = vunpack.c.l.b16 %v1136
    %v1208 = vunpack.c.l.b16 %v1137
    %v1209 = vunpack.c.l.b16 %v1138
    %v1210 = vunpack.c.l.b16 %v1139
    %v1211 = vunpack.c.l.b16 %v1140
    %v1212 = vunpack.c.l.b16 %v1141
    %v1213 = vunpack.c.l.b16 %v1142
    %v1214 = vunpack.c.l.b16 %v1143
    %v1215 = vunpack.c.l.b16 %v1144
    %v1216 = vunpack.c.l.b16 %v1145
    %v1217 = vunpack.c.l.b16 %v1146
    %v1218 = vunpack.c.l.b16 %v1147
    %v1219 = vunpack.c.l.b16 %v1148
    %v1220 = vunpack.c.l.b16 %v1149
    %v1221 = vunpack.c.l.b16 %v1150
    %v1222 = vunpack.c.l.b16 %v1151
    %v1223 = vunpack.c.l.b16 %v1152
    %v1224 = vunpack.c.l.b16 %v1153
    %v1225 = vunpack.c.l.b16 %v1154
    %v1226 = vunpack.c.l.b16 %v1155
    %v1227 = vunpack.c.l.b16 %v1156
    %v1228 = vunpack.c.l.b16 %v1157
    %v1229 = vunpack.c.l.b16 %v1158
    %v1230 = vunpack.c.l.b16 %v1159
    %v1231 = vunpack.c.l.b16 %v1160
    %v1232 = vunpack.c.l.b16 %v1161
    %v1233 = vunpack.c.l.b16 %v1162
    %v1234 = vunpack.c.l.b16 %v1163
    %v1235 = vpack.c.b16 %v1204, %v1203
    %v1236 = vpack.c.b16 %v1206, %v1205
    %v1237 = vpack.c.b16 %v1208, %v1207
    %v1238 = vpack.c.b16 %v1210, %v1209
    %v1239 = vpack.c.b16 %v1212, %v1211
    %v1240 = vpack.c.b16 %v1214, %v1213
    %v1241 = vpack.c.b16 %v1216, %v1215
    %v1242 = vpack.c.b16 %v1218, %v1217
    %v1243 = vpack.c.b16 %v1220, %v1219
    %v1244 = vpack.c.b16 %v1222, %v1221
    %v1245 = vpack.c.b16 %v1224, %v1223
    %v1246 = vpack.c.b16 %v1226, %v1225
    %v1247 = vpack.c.b16 %v1228, %v1227
    %v1248 = vpack.c.b16 %v1230, %v1229
    %v1249 = vpack.c.b16 %v1232, %v1231
    %v1250 = vpack.c.b16 %v1234, %v1233
    %1267 = vmatprep.subr.bf16.mxu0 0
    %1268 = vmatpush1.bf16.msra.mxu0 %v1235
    %1269 = vmatprep.subr.bf16.mxu0 0
    %1270 = vmatpush1.bf16.msra.mxu0 %v1236
    %1271 = vmatprep.subr.bf16.mxu0 0
    %1272 = vmatpush1.bf16.msra.mxu0 %v1237
    %1273 = vmatprep.subr.bf16.mxu0 0
    %1274 = vmatpush1.bf16.msra.mxu0 %v1238
    %1275 = vmatprep.subr.bf16.mxu0 0
    %1276 = vmatpush1.bf16.msra.mxu0 %v1239
    %1277 = vmatprep.subr.bf16.mxu0 0
    %1278 = vmatpush1.bf16.msra.mxu0 %v1240
    %1279 = vmatprep.subr.bf16.mxu0 0
    %1280 = vmatpush1.bf16.msra.mxu0 %v1241
    %1281 = vmatprep.subr.bf16.mxu0 0
    %1282 = vmatpush1.bf16.msra.mxu0 %v1242
    %1283 = vmatprep.subr.bf16.mxu0 0
    %1284 = vmatpush1.bf16.msra.mxu0 %v1243
    %1285 = vmatprep.subr.bf16.mxu0 0
    %1286 = vmatpush1.bf16.msra.mxu0 %v1244
    %1287 = vmatprep.subr.bf16.mxu0 0
    %1288 = vmatpush1.bf16.msra.mxu0 %v1245
    %1289 = vmatprep.subr.bf16.mxu0 0
    %1290 = vmatpush1.bf16.msra.mxu0 %v1246
    %1291 = vmatprep.subr.bf16.mxu0 0
    %1292 = vmatpush1.bf16.msra.mxu0 %v1247
    %1293 = vmatprep.subr.bf16.mxu0 0
    %1294 = vmatpush1.bf16.msra.mxu0 %v1248
    %1295 = vmatprep.subr.bf16.mxu0 0
    %1296 = vmatpush1.bf16.msra.mxu0 %v1249
    %1297 = vmatprep.subr.bf16.mxu0 0
    %1298 = vmatpush1.bf16.msra.mxu0 %v1250
    %1299 = vmatprep.mubr.bf16.mxu0 %v1131
    %1300 = vmatmul.mubr.bf16.gmra.mrb[0].mxu0 %v1130
    %v1301 = vpop.f32.mrb[0].mxu0
    %v1302 = vadd.f32 %v1169, %v1301
    %v1303 = vpop.f32.mrb[0].mxu0
    %v1304 = vpop.f32.mrb[0].mxu0
    %v1305 = vpop.f32.mrb[0].mxu0
    %1306 = vdwg.mxu0
    %v1307 = vmax.f32 %v1302, 0.0
    %v1308 = vld [vmem:[#allocation16] sm:$0xff]
    %vm1309 = vcmp.ge.f32.partialorder %v1308, 0.5
    %v1310 = vmul.f32 %v1307, 2.0
    %v1311 = vsel %vm1309, %v1310, 0.0
    %v1312 = vpack.c.bf16 %v1311, %v1311
    %v1313 = vld [vmem:[#allocation11] sm:$0xf]
    %v1314 = vld [vmem:[#allocation11 + $0x4] sm:$0xf]
    %v1315 = vld [vmem:[#allocation11 + $0x8] sm:$0xf]
    %v1316 = vld [vmem:[#allocation11 + $0xc] sm:$0xf]
    %v1317 = vld [vmem:[#allocation11 + $0x10] sm:$0xf]
    %v1318 = vld [vmem:[#allocation11 + $0x14] sm:$0xf]
    %v1319 = vld [vmem:[#allocation11 + $0x18] sm:$0xf]
    %v1320 = vld [vmem:[#allocation11 + $0x1c] sm:$0xf]
    %v1321 = vld [vmem:[#allocation11 + $0x20] sm:$0xf]
    %v1322 = vld [vmem:[#allocation11 + $0x24] sm:$0xf]
    %v1323 = vld [vmem:[#allocation11 + $0x28] sm:$0xf]
    %v1324 = vld [vmem:[#allocation11 + $0x2c] sm:$0xf]
    %v1325 = vld [vmem:[#allocation11 + $0x30] sm:$0xf]
    %v1326 = vld [vmem:[#allocation11 + $0x34] sm:$0xf]
    %v1327 = vld [vmem:[#allocation11 + $0x38] sm:$0xf]
    %v1328 = vld [vmem:[#allocation11 + $0x3c] sm:$0xf]
    %v1329 = vld [vmem:[#allocation13] sm:$0x1]
    %v1331 = vlaneseq
    %v1332 = vshrl.u32 %v1331, 7
    %v1333 = vsub.s32 0, %v1332
    %v1334 = vrot.slane %v1329, %v1333
    %v1352 = vunpack.c.l.b16 %v1313
    %v1353 = vunpack.c.l.b16 %v1314
    %v1354 = vunpack.c.l.b16 %v1315
    %v1355 = vunpack.c.l.b16 %v1316
    %v1356 = vunpack.c.l.b16 %v1317
    %v1357 = vunpack.c.l.b16 %v1318
    %v1358 = vunpack.c.l.b16 %v1319
    %v1359 = vunpack.c.l.b16 %v1320
    %v1360 = vunpack.c.l.b16 %v1321
    %v1361 = vunpack.c.l.b16 %v1322
    %v1362 = vunpack.c.l.b16 %v1323
    %v1363 = vunpack.c.l.b16 %v1324
    %v1364 = vunpack.c.l.b16 %v1325
    %v1365 = vunpack.c.l.b16 %v1326
    %v1366 = vunpack.c.l.b16 %v1327
    %v1367 = vunpack.c.l.b16 %v1328
    %v1368 = vpack.c.b16 %v1353, %v1352
    %v1369 = vpack.c.b16 %v1355, %v1354
    %v1370 = vpack.c.b16 %v1357, %v1356
    %v1371 = vpack.c.b16 %v1359, %v1358
    %v1372 = vpack.c.b16 %v1361, %v1360
    %v1373 = vpack.c.b16 %v1363, %v1362
    %v1374 = vpack.c.b16 %v1365, %v1364
    %v1375 = vpack.c.b16 %v1367, %v1366
    %1384 = vmatprep.subr.bf16.mxu0 0
    %1385 = vmatpush1.bf16.msra.mxu0 %v1368
    %1386 = vmatprep.subr.bf16.mxu0 0
    %1387 = vmatpush1.bf16.msra.mxu0 %v1369
    %1388 = vmatprep.subr.bf16.mxu0 0
    %1389 = vmatpush1.bf16.msra.mxu0 %v1370
    %1390 = vmatprep.subr.bf16.mxu0 0
    %1391 = vmatpush1.bf16.msra.mxu0 %v1371
    %1392 = vmatprep.subr.bf16.mxu0 0
    %1393 = vmatpush1.bf16.msra.mxu0 %v1372
    %1394 = vmatprep.subr.bf16.mxu0 0
    %1395 = vmatpush1.bf16.msra.mxu0 %v1373
    %1396 = vmatprep.subr.bf16.mxu0 0
    %1397 = vmatpush1.bf16.msra.mxu0 %v1374
    %1398 = vmatprep.subr.bf16.mxu0 0
    %1399 = vmatpush1.bf16.msra.mxu0 %v1375
    %1400 = vmatprep.subr.bf16.mxu0 0
    %1401 = vmatpush1.bf16.msra.mxu0 0
    %1402 = vmatprep.subr.bf16.mxu0 0
    %1403 = vmatpush1.bf16.msra.mxu0 0
    %1404 = vmatprep.subr.bf16.mxu0 0
    %1405 = vmatpush1.bf16.msra.mxu0 0
    %1406 = vmatprep.subr.bf16.mxu0 0
    %1407 = vmatpush1.bf16.msra.mxu0 0
    %1408 = vmatprep.subr.bf16.mxu0 0
    %1409 = vmatpush1.bf16.msra.mxu0 0
    %1410 = vmatprep.subr.bf16.mxu0 0
    %1411 = vmatpush1.bf16.msra.mxu0 0
    %1412 = vmatprep.subr.bf16.mxu0 0
    %1413 = vmatpush1.bf16.msra.mxu0 0
    %1414 = vmatprep.subr.bf16.mxu0 0
    %1415 = vmatpush1.bf16.msra.mxu0 0
    %1416 = vmatprep.mubr.bf16.mxu0 0
    %1417 = vmatmul.mubr.bf16.gmra.mrb[0].mxu0 %v1312
    %v1418 = vpop.f32.mrb[0].mxu0
    %v1419 = vadd.f32 %v1334, %v1418
    %v1420 = vpop.f32.mrb[0].mxu0
    %v1421 = vpop.f32.mrb[0].mxu0
    %v1422 = vpop.f32.mrb[0].mxu0
    %1423 = vdwg.mxu0
    %1424 = vst [vmem:[#allocation17] sm:$0xff] %v1419
    // Predicated region
    $region74: #{tpu_custom_call.1} parent=1 // pred_check
      _
    $region75: #{tpu_custom_call.1} parent=1 // pred_check_branch
      %1426 = sbr.rel (0) target = $region77
    $region76: #{tpu_custom_call.1} parent=1 // pred_region
      %s1428 = ssub.s32 128, 128
      %1429 = vsyncadd [#allocation4], %s1428
      %s1431 = sshll.u32 [#allocation17], 4
      %s1432 = int_to_ptr.vmem [resolvable:$true] %s1431
      %1434 = dma.vmem_to_hbm [thread:$0]  %s1432, 128, %s9, [#allocation4]
    $region77: #{tpu_custom_call.1} parent=1 // pred_fallthru
      _
    // Predicated region
    $region78: #{tpu_custom_call.1} parent=1 // pred_check
      _
    $region79: #{tpu_custom_call.1} parent=1 // pred_check_branch
      %1436 = sbr.rel (0) target = $region81
    $region80: #{tpu_custom_call.1} parent=1 // pred_region
      %1437 = dma.done [#allocation4], 128
    $region81: #{tpu_custom_call.1} parent=1 // pred_fallthru
      _
    %1438 = vsyncpa [#allocation3], 1
    %1439 = vsyncpa [#allocation6], 1
    %1440 = vsyncpa [#allocation9], 1
    %1441 = vsyncpa [#allocation12], 1
    %1442 = vsyncpa [#allocation15], 1
    %1443 = vsyncpa [#allocation4], 1

</llo_original>
